<compile_context>
chip_gen: v5e
topology: v5e:2x2
jax: 0.10.0
libtpu: 0.0.40
codegen_flags: <defaults>
</compile_context>

<pallas_src>
import functools

import jax
import jax.numpy as jnp
from jax import lax
from jax.experimental import pallas as pl
from jax.experimental.pallas import tpu as pltpu


# ----------------------------------------------------------------------------
# Helpers
# ----------------------------------------------------------------------------
def _pick_tile(n: int, target: int) -> int:
    """Largest multiple of 8 that divides n and is <= target; else n itself
    (a full-extent block is always legal)."""
    if n <= target:
        return n
    best = 0
    for t in range(8, target + 1, 8):
        if n % t == 0:
            best = t
    return best if best else n


def _attn_vmem_limit(itemsize: int, tq: int, n: int, c: int):
    """Working-set estimate for the attention kernel; only override the
    default scoped VMEM limit when the estimate exceeds it."""
    bufs = itemsize * (2 * tq * c          # Q tile (double-buffered)
                       + 2 * 2 * n * c     # K, V (double-buffered)
                       + 2 * c * c         # W_proj^T
                       + 2 * c             # bias
                       + tq * c            # ctx scratch
                       + 2 * tq * c)       # output tile
    interm = 4 * (2 * tq * n + 4 * tq * c)  # f32 scores / exp / acc headroom
    est = int((bufs + interm) * 1.25)
    if est <= 32 * 1024 * 1024:
        return None
    return min(est, 98 * 1024 * 1024)


# ----------------------------------------------------------------------------
# Kernel 1: fused qkv projection  (scale already folded into the q columns)
# ----------------------------------------------------------------------------
def _qkv_kernel(x_ref, w_ref, o_ref):
    # x_ref: (1, TQP, C), w_ref: (C, 3C)  -> o_ref: (1, TQP, 3C)
    o_ref[0] = jnp.dot(
        x_ref[0], w_ref[...], preferred_element_type=jnp.float32
    ).astype(o_ref.dtype)


def _qkv_projection(x, w_qkv_t, *, tq):
    B, N, C = x.shape
    C3 = w_qkv_t.shape[1]
    return pl.pallas_call(
        _qkv_kernel,
        out_shape=jax.ShapeDtypeStruct((B, N, C3), x.dtype),
        grid_spec=pltpu.PrefetchScalarGridSpec(
            num_scalar_prefetch=0,
            grid=(B, N // tq),
            in_specs=[
                pl.BlockSpec((1, tq, C), lambda b, i: (b, i, 0)),   # x tile
                pl.BlockSpec((C, C3), lambda b, i: (0, 0)),         # W_qkv^T
            ],
            out_specs=pl.BlockSpec((1, tq, C3), lambda b, i: (b, i, 0)),
        ),
        compiler_params=pltpu.CompilerParams(
            dimension_semantics=("parallel", "parallel")),
    )(x, w_qkv_t)


# ----------------------------------------------------------------------------
# Kernel 2: per-(batch, q-tile) multi-head attention + full-C output proj.
#   * all heads handled in-kernel (static lane slices of the (.., C) blocks)
#   * K/V blocks constant in the q-tile index -> fetched once per batch
#   * per-head results gathered into a (tq, C) scratch, then one (C)-deep
#     projection matmul.
# ----------------------------------------------------------------------------
def _mhsa_proj_kernel(num_heads, head_dim,
                      q_ref, k_ref, v_ref, wp_ref, b_ref, o_ref, ctx_ref):
    q = q_ref[0]            # (TQ, C)  -- scale pre-folded into q columns
    k = k_ref[0]            # (N,  C)
    v = v_ref[0]            # (N,  C)

    # Static Python loop over the (small, static) head count: static lane
    # offsets avoid dynamic lane-slice restrictions and relayouts.
    for h in range(num_heads):
        sl = slice(h * head_dim, (h + 1) * head_dim)
        qh = q[:, sl]                                   # (TQ, hd)
        kh = k[:, sl]                                   # (N,  hd)
        vh = v[:, sl]                                   # (N,  hd)

        # scores: contract the last dims of q and k directly (no transpose).
        s = lax.dot_general(qh, kh, (((1,), (1,)), ((), ())),
                            preferred_element_type=jnp.float32)    # (TQ, N)
        m = jnp.max(s, axis=-1, keepdims=True)
        p = jnp.exp(s - m)                                         # f32
        l = jnp.sum(p, axis=-1, keepdims=True)                     # (TQ, 1)

        # unnormalized p @ v, then exact deferred normalization on (TQ, hd).
        oh = jnp.dot(p.astype(vh.dtype), vh,
                     preferred_element_type=jnp.float32)
        oh = oh * pl.reciprocal(l, approx=False)

        ctx_ref[:, sl] = oh.astype(ctx_ref.dtype)

    # single full-C projection: (TQ, C) @ (C, C) at full MXU contraction depth
    out = jnp.dot(ctx_ref[...], wp_ref[...],
                  preferred_element_type=jnp.float32)
    o_ref[0] = (out + b_ref[...].astype(jnp.float32)).astype(o_ref.dtype)


def _attention_proj(qkv, w_proj_t, b_proj2d, *, num_heads, head_dim, tq,
                    out_dtype):
    B, N, C3 = qkv.shape
    C = C3 // 3
    kernel = functools.partial(_mhsa_proj_kernel, num_heads, head_dim)
    vmem_limit = _attn_vmem_limit(jnp.dtype(qkv.dtype).itemsize, tq, N, C)
    return pl.pallas_call(
        kernel,
        out_shape=jax.ShapeDtypeStruct((B, N, C), out_dtype),
        grid_spec=pltpu.PrefetchScalarGridSpec(
            num_scalar_prefetch=0,
            grid=(B, N // tq),
            in_specs=[
                # Q tile: columns [0, C) of the qkv activation.
                pl.BlockSpec((1, tq, C), lambda b, i: (b, i, 0)),
                # K (all tokens): columns [C, 2C); constant in the q-tile idx.
                pl.BlockSpec((1, N, C), lambda b, i: (b, 0, 1)),
                # V (all tokens): columns [2C, 3C); constant in the q-tile idx.
                pl.BlockSpec((1, N, C), lambda b, i: (b, 0, 2)),
                # W_proj^T and bias: constant blocks.
                pl.BlockSpec((C, C), lambda b, i: (0, 0)),
                pl.BlockSpec((1, C), lambda b, i: (0, 0)),
            ],
            out_specs=pl.BlockSpec((1, tq, C), lambda b, i: (b, i, 0)),
            scratch_shapes=[pltpu.VMEM((tq, C), out_dtype)],
        ),
        compiler_params=pltpu.CompilerParams(
            dimension_semantics=("parallel", "parallel"),
            vmem_limit_bytes=vmem_limit),
    )(qkv, qkv, qkv, w_proj_t, b_proj2d)


# ----------------------------------------------------------------------------
# Public forward: mirrors Attention.forward (qkv_bias=False, qk_norm=False,
# dropout=0.0 -> inference no-ops).
# ----------------------------------------------------------------------------
def attention_forward(x, w_qkv, w_proj, b_proj, *, num_heads: int,
                      q_tile: int = 256, proj_tile: int = 512):
    """x: (B, N, C); w_qkv: (3C, C); w_proj: (C, C); b_proj: (C,)."""
    B, N, C = x.shape
    assert C % num_heads == 0, "dim should be divisible by num_heads"
    head_dim = C // num_heads
    scale = head_dim ** -0.5

    # One-time parameter prep (in a real model, hoist to parameter load):
    #  - transpose weights so kernels never transpose,
    #  - fold the attention scale into the q columns of W_qkv (exact for
    #    power-of-two head dims).
    w_qkv_t = jnp.transpose(w_qkv)                      # (C, 3C)
    w_qkv_t = w_qkv_t.at[:, :C].multiply(scale)         # q columns pre-scaled
    w_proj_t = jnp.transpose(w_proj)                    # (C, C)
    b_proj2d = b_proj.reshape(1, C)

    tqp = _pick_tile(N, proj_tile)                      # qkv-projection tile
    tq = _pick_tile(N, q_tile)                          # attention q tile

    qkv = _qkv_projection(x, w_qkv_t, tq=tqp)           # (B, N, 3C)
    return _attention_proj(qkv, w_proj_t, b_proj2d,
                           num_heads=num_heads, head_dim=head_dim,
                           tq=tq, out_dtype=x.dtype)


# ----------------------------------------------------------------------------
# Pure-JAX reference mirroring the PyTorch forward pass.
# ----------------------------------------------------------------------------
def attention_reference(x, w_qkv, w_proj, b_proj, *, num_heads: int):
    B, N, C = x.shape
    head_dim = C // num_heads
    scale = head_dim ** -0.5
    qkv = jnp.einsum("bnc,oc->bno", x, w_qkv)            # (B, N, 3C)
    qkv = qkv.reshape(B, N, 3, num_heads, head_dim)
    qkv = jnp.transpose(qkv, (2, 0, 3, 1, 4))            # (3, B, H, N, hd)
    q, k, v = qkv[0], qkv[1], qkv[2]
    attn = jnp.einsum("bhnd,bhmd->bhnm", q * scale, k)
    attn = jax.nn.softmax(attn, axis=-1)
    out = jnp.einsum("bhnm,bhmd->bhnd", attn, v)
    out = jnp.transpose(out, (0, 2, 1, 3)).reshape(B, N, C)
    return jnp.einsum("bnc,oc->bno", out, w_proj) + b_proj


if __name__ == "__main__":
    # Small shapes consistent with the module (dim divisible by num_heads=8).
    # Small tile overrides exercise the multi-q-tile grid and the
    # constant-index K/V blocks.
    B, N, C = 2, 64, 128
    num_heads = 8

    key = jax.random.PRNGKey(0)
    kx, kqkv, kproj, kb = jax.random.split(key, 4)

    x = jax.random.normal(kx, (B, N, C), dtype=jnp.float32)
    # Deterministic synthetic parameters (nn.Linear-style shapes).
    w_qkv = jax.random.normal(kqkv, (3 * C, C), dtype=jnp.float32) * (C ** -0.5)
    w_proj = jax.random.normal(kproj, (C, C), dtype=jnp.float32) * (C ** -0.5)
    b_proj = jax.random.normal(kb, (C,), dtype=jnp.float32) * 0.02

    out = attention_forward(x, w_qkv, w_proj, b_proj, num_heads=num_heads,
                            q_tile=8, proj_tile=16)
    out = jax.block_until_ready(out)

    ref = attention_reference(x, w_qkv, w_proj, b_proj, num_heads=num_heads)
    assert out.shape == (B, N, C)
    assert jnp.allclose(out, ref, atol=5e-4, rtol=5e-4), "mismatch vs reference"

    # TODO(synk): dropout / qk_norm are inference no-ops here (p=0, Identity),
    # matching the module defaults.
    print("KERNEL_OK")
</pallas_src>

<mosaic_0001>
module attributes {stable_mosaic.version = 11 : i64} {
  func.func @_qkv_kernel(%arg0: i32, %arg1: i32, %arg2: memref<1x16x128xf32, #tpu.memory_space<vmem>>, %arg3: memref<128x384xf32, #tpu.memory_space<vmem>>, %arg4: memref<1x16x384xf32, #tpu.memory_space<vmem>>) attributes {dimension_semantics = [#tpu.dimension_semantics<parallel>, #tpu.dimension_semantics<parallel>], iteration_bounds = array<i64: 2, 4>, scalar_prefetch = 0 : i64, scratch_operands = 0 : i64, tpu.core_type = #tpu.core_type<tc>, window_params = [{transform_indices = @transform_0, window_bounds = array<i64: 1, 16, 128>}, {pipeline_mode = #tpu.pipeline_mode<synchronous>, transform_indices = @transform_1, window_bounds = array<i64: 128, 384>}, {transform_indices = @transform_2, window_bounds = array<i64: 1, 16, 384>}]} {
    %c0 = arith.constant 0 : index
    %c0_0 = arith.constant 0 : index
    %c0_1 = arith.constant 0 : index
    %0 = vector.load %arg2[%c0, %c0_0, %c0_1] : memref<1x16x128xf32, #tpu.memory_space<vmem>>, vector<1x16x128xf32>
    %1 = vector.shape_cast %0 : vector<1x16x128xf32> to vector<16x128xf32>
    %c0_2 = arith.constant 0 : index
    %c0_3 = arith.constant 0 : index
    %2 = vector.load %arg3[%c0_2, %c0_3] : memref<128x384xf32, #tpu.memory_space<vmem>>, vector<128x384xf32>
    %cst = arith.constant dense<0.000000e+00> : vector<16x384xf32>
    %3 = tpu.matmul %1, %2, %cst {dimension_numbers = #tpu.dot_dimension_numbers<[1], [0], [0], [1], [0, 0, 1, 1], [], []>} : vector<16x128xf32>, vector<128x384xf32>, vector<16x384xf32> -> vector<16x384xf32>
    %c0_4 = arith.constant 0 : index
    %c0_5 = arith.constant 0 : index
    %c0_6 = arith.constant 0 : index
    %4 = vector.load %arg4[%c0_4, %c0_5, %c0_6] : memref<1x16x384xf32, #tpu.memory_space<vmem>>, vector<1x16x384xf32>
    %5 = vector.shape_cast %4 : vector<1x16x384xf32> to vector<16x384xf32>
    %6 = vector.shape_cast %3 : vector<16x384xf32> to vector<1x16x384xf32>
    tpu.vector_store %arg4[%c0_4, %c0_5, %c0_6], %6 {strides = array<i32>} : memref<1x16x384xf32, #tpu.memory_space<vmem>>, vector<1x16x384xf32>,
    return
  }
  func.func @transform_0(%arg0: i32, %arg1: i32) -> (i32, i32, i32) {
    %c0_i32 = arith.constant 0 : i32
    %c0_i32_0 = arith.constant 0 : i32
    return %arg0, %arg1, %c0_i32 : i32, i32, i32
  }
  func.func @transform_1(%arg0: i32, %arg1: i32) -> (i32, i32) {
    %c0_i32 = arith.constant 0 : i32
    %c0_i32_0 = arith.constant 0 : i32
    %c0_i32_1 = arith.constant 0 : i32
    return %c0_i32, %c0_i32_0 : i32, i32
  }
  func.func @transform_2(%arg0: i32, %arg1: i32) -> (i32, i32, i32) {
    %c0_i32 = arith.constant 0 : i32
    %c0_i32_0 = arith.constant 0 : i32
    return %arg0, %arg1, %c0_i32 : i32, i32, i32
  }
}

</mosaic_0001>

<llo_original>
// kernel: tpu_custom_call.1
$region0: #{tpu_custom_call.1}
  #allocation0 [shape = 'u32[]', space=smem, size = 0x4, offset = 0x4, fixed_abs, tag = 'smem constant byte address 0x4 - core index']
  #allocation1 [shape = 'u32[72,128]{1,0:T(1,128)}', space=vmem, size = 0x9000, scoped, tag = 'internal scratch']
  %s0 = inlined_call_operand.hbm [shape: f32[2,64,128], index: 0, kind: input, shape index: {}]
  %s1 = inlined_call_operand.hbm [shape: f32[128,384], index: 1, kind: input, shape index: {}]
  %s2 = inlined_call_operand.hbm [shape: f32[2,64,384], index: 2, kind: output, shape index: {}]
  %s3 = sld [smem:[#allocation0]]
  $region49: #{tpu_custom_call.1} parent=0
    _
  %s5 = ssub.s32 1, %s3
  %s6 = scalar_select 0, %s5, %s3
  $region1: #{tpu_custom_call.1} parent=0
    #allocation2 [shape = 'u8[16384]{0}', space=vmem, size = 0x4000, scoped, tag = 'input window, operand 0']
    #allocation3 [shape = 's32[2]{0}', space=sflag, size = 0x8, scoped, tag = 'scoped memory for tpu_custom_call.1']
    #allocation4 [shape = 's32[2]{0}', space=sflag, size = 0x8, scoped, tag = 'scoped memory for tpu_custom_call.1']
    #allocation5 [shape = 'u8[196608]{0}', space=vmem, size = 0x30000, scoped, tag = 'input window, operand 1, single buffered']
    #allocation6 [shape = 's32[1]{0}', space=sflag, size = 0x4, scoped, tag = 'scoped memory for tpu_custom_call.1']
    #allocation7 [shape = 'u8[49152]{0}', space=vmem, size = 0xc000, scoped, tag = 'output window, operand 0']
    %7 = vsyncpa [#allocation3], 0
    %s8 = scalar_lea.sflag [#allocation3], 1
    %9 = vsyncpa %s8, 0
    %10 = vsyncpa [#allocation6], 0
    %11 = vsyncpa [#allocation4], 0
    %s12 = scalar_lea.sflag [#allocation4], 1
    %13 = vsyncpa %s12, 0
    loop: start=0, step=1, limit=10
    $region2: #{tpu_custom_call.1} parent=1 // loop_pre_header
      _
    $region3: #{tpu_custom_call.1} parent=1 // loop_header
      %s15 = sphi 0, %s19
      %p16 = scmp.ge.s32.totalorder %s15, 10
      %s22 = sphi 0, %s34
      %s23 = sphi 0, %s30
      %s24 = sphi 0, %s22
      %s25 = sphi 0, %s23
      %s26 = sphi 0, %s24
      %s27 = sphi 0, %s25
      %s39 = sphi 0, %s41
      %s42 = sphi 0, %s39
      %s43 = sphi 0, %s42
      %s59 = sphi 0, %s43
      %s63 = sphi 0, %s63
      %s65 = sphi 0, %s63
      %s66 = sphi 0, %s65
      %s80 = sphi 0, %s66
      %s88 = sphi 0, %s90
      %s91 = sphi 0, %s88
      %s92 = sphi 0, %s91
      %s108 = sphi 0, %s92
    $region4: #{tpu_custom_call.1} parent=1 // loop_header_branch
      %18 = sbr.rel (%p16) target = $region8
    $region5: #{tpu_custom_call.1} parent=1 // loop_body
      %s20 = ssub.s32 %s15, 1
      %s21 = ssub.s32 %s15, 2
      %s28 = sadd.s32 1, %s23
      %p29 = scmp.ge.s32.totalorder %s28, 4
      %s30 = scalar_select %p29, 0, %s28
      %s31 = sadd.s32 1, %s22
      %s32 = scalar_select %p29, %s31, %s22
      %p33 = scmp.ge.s32.totalorder %s32, 2
      %s34 = scalar_select %p33, 0, %s32
      %s35 = ssub.s32 %s22, %s34
      %s36 = ssub.s32 %s23, %s30
      %s37 = sor.u32 %s35, %s36
      %p38 = scmp.eq.s32.totalorder %s37, 0
      %s40 = sadd.s32 %s39, 1
      %s41 = scalar_select %p38, %s39, %s40
      %p44 = pneg %p38
      %p45 = scmp.eq.s32.totalorder %s15, 7
      %p46 = por %p44, %p45
      %p47 = scmp.ne.s32.totalorder %s39, %s42
      %p48 = scmp.eq.s32.totalorder %s15, 0
      %p49 = por %p47, %p48
      %p50 = scmp.ne.s32.totalorder %s39, %s42
      %p51 = scmp.eq.s32.totalorder %s20, 7
      %p52 = por %p50, %p51
      %p53 = scmp.ne.s32.totalorder %s42, %s43
      %p54 = scmp.eq.s32.totalorder %s20, 0
      %p55 = por %p53, %p54
      %p56 = scmp.ne.s32.totalorder %s42, %s43
      %p57 = scmp.eq.s32.totalorder %s21, 7
      %p58 = por %p56, %p57
      %p60 = scmp.ne.s32.totalorder %s43, %s59
      %p61 = scmp.eq.s32.totalorder %s21, 0
      %p62 = por %p60, %p61
      %s64 = sadd.s32 %s63, 1
      %p67 = scmp.eq.s32.totalorder %s15, 7
      %p68 = scmp.ne.s32.totalorder %s63, %s65
      %p69 = scmp.eq.s32.totalorder %s15, 0
      %p70 = por %p68, %p69
      %p71 = scmp.ne.s32.totalorder %s63, %s65
      %p72 = scmp.eq.s32.totalorder %s20, 7
      %p73 = por %p71, %p72
      %p74 = scmp.ne.s32.totalorder %s65, %s66
      %p75 = scmp.eq.s32.totalorder %s20, 0
      %p76 = por %p74, %p75
      %p77 = scmp.ne.s32.totalorder %s65, %s66
      %p78 = scmp.eq.s32.totalorder %s21, 7
      %p79 = por %p77, %p78
      %p81 = scmp.ne.s32.totalorder %s66, %s80
      %p82 = scmp.eq.s32.totalorder %s21, 0
      %p83 = por %p81, %p82
      %s84 = ssub.s32 %s22, %s34
      %s85 = ssub.s32 %s23, %s30
      %s86 = sor.u32 %s84, %s85
      %p87 = scmp.eq.s32.totalorder %s86, 0
      %s89 = sadd.s32 %s88, 1
      %s90 = scalar_select %p87, %s88, %s89
      %p93 = pneg %p87
      %p94 = scmp.eq.s32.totalorder %s15, 7
      %p95 = por %p93, %p94
      %p96 = scmp.ne.s32.totalorder %s88, %s91
      %p97 = scmp.eq.s32.totalorder %s15, 0
      %p98 = por %p96, %p97
      %p99 = scmp.ne.s32.totalorder %s88, %s91
      %p100 = scmp.eq.s32.totalorder %s20, 7
      %p101 = por %p99, %p100
      %p102 = scmp.ne.s32.totalorder %s91, %s92
      %p103 = scmp.eq.s32.totalorder %s20, 0
      %p104 = por %p102, %p103
      %p105 = scmp.ne.s32.totalorder %s91, %s92
      %p106 = scmp.eq.s32.totalorder %s21, 7
      %p107 = por %p105, %p106
      %p109 = scmp.ne.s32.totalorder %s92, %s108
      %p110 = scmp.eq.s32.totalorder %s21, 0
      %p111 = por %p109, %p110
      %p112 = scmp.le.s32.totalorder 1, %s15
      %p113 = scmp.lt.s32.totalorder %s15, 9
      %p114 = pnand %p112, %p113
      %p115 = pneg %p114
      // Predicated region
      $region9: #{tpu_custom_call.1} parent=5 // pred_check
        _
      $region10: #{tpu_custom_call.1} parent=5 // pred_check_branch
        %117 = sbr.rel (%p114) target = $region12
      $region11: #{tpu_custom_call.1} parent=5 // pred_region
        %s118 = ssub.s32 %s15, 1
        // Predicated region
        $region13: #{tpu_custom_call.1} parent=11 // pred_check
          %p119 = pneg %p76
        $region14: #{tpu_custom_call.1} parent=11 // pred_check_branch
          %121 = sbr.rel (%p119) target = $region16
        $region15: #{tpu_custom_call.1} parent=11 // pred_region
          %123 = vsyncadd [#allocation6], 0
          %s124 = sshll.u32 %s1, 4
          %s125 = int_to_ptr.hbm [resolvable:$true] %s124
          %s126 = sshll.u32 [#allocation5], 4
          %s127 = int_to_ptr.vmem [resolvable:$true] %s126
          %132 = dma.hbm_to_vmem [thread:$0]  %s125, 6144, %s127, [#allocation6], 384, 384, 24
        $region16: #{tpu_custom_call.1} parent=11 // pred_fallthru
          _
      $region12: #{tpu_custom_call.1} parent=5 // pred_fallthru
        _
      %p133 = scmp.lt.s32.totalorder %s15, 8
      // Predicated region
      $region17: #{tpu_custom_call.1} parent=5 // pred_check
        %p134 = pneg %p133
      $region18: #{tpu_custom_call.1} parent=5 // pred_check_branch
        %136 = sbr.rel (%p134) target = $region20
      $region19: #{tpu_custom_call.1} parent=5 // pred_region
        // Predicated region
        $region21: #{tpu_custom_call.1} parent=19 // pred_check
          %p137 = pneg %p49
        $region22: #{tpu_custom_call.1} parent=19 // pred_check_branch
          %139 = sbr.rel (%p137) target = $region24
        $region23: #{tpu_custom_call.1} parent=19 // pred_region
          %s140 = sand.u32 %s39, 1
          %s141 = scalar_lea.sflag [#allocation3], %s140
          %s142 = sand.u32 %s39, 1
          %s143 = smul.addr %s142, 16
          %s144 = scalar_lea.vmem [#allocation2], %s143
          %s145 = smul.u32 2, %s23
          %147 = vsyncadd %s141, 0
          %s148 = smul.addr %s22, 8
          %s149 = sadd.s32 %s145, %s148
          %s150 = smul.addr %s149, 8
          %s151 = scalar_lea.hbm %s0, %s150
          %s152 = sshll.u32 %s151, 4
          %s153 = int_to_ptr.hbm [resolvable:$true] %s152
          %s154 = sshll.u32 %s144, 4
          %s155 = int_to_ptr.vmem [resolvable:$true] %s154
          %160 = dma.hbm_to_vmem [thread:$0]  %s153, 256, %s155, %s141, 128, 128, 8
        $region24: #{tpu_custom_call.1} parent=19 // pred_fallthru
          _
      $region20: #{tpu_custom_call.1} parent=5 // pred_fallthru
        _
      %p161 = scmp.le.s32.totalorder 1, %s15
      %p162 = scmp.lt.s32.totalorder %s15, 9
      %p163 = pnand %p161, %p162
      %p164 = pneg %p163
      // Predicated region
      $region25: #{tpu_custom_call.1} parent=5 // pred_check
        _
      $region26: #{tpu_custom_call.1} parent=5 // pred_check_branch
        %166 = sbr.rel (%p163) target = $region28
      $region27: #{tpu_custom_call.1} parent=5 // pred_region
        %s167 = ssub.s32 %s15, 1
        %s168 = sand.u32 %s42, 1
        %s169 = scalar_lea.sflag [#allocation3], %s168
        %s170 = sand.u32 %s42, 1
        %s171 = smul.addr %s170, 16
        %s172 = scalar_lea.vmem [#allocation2], %s171
        // Predicated region
        $region29: #{tpu_custom_call.1} parent=27 // pred_check
          %p173 = pneg %p55
        $region30: #{tpu_custom_call.1} parent=27 // pred_check_branch
          %175 = sbr.rel (%p173) target = $region32
        $region31: #{tpu_custom_call.1} parent=27 // pred_region
          %177 = dma.done %s169, 256
        $region32: #{tpu_custom_call.1} parent=27 // pred_fallthru
          _
        // Predicated region
        $region33: #{tpu_custom_call.1} parent=27 // pred_check
          %p178 = pneg %p76
        $region34: #{tpu_custom_call.1} parent=27 // pred_check_branch
          %180 = sbr.rel (%p178) target = $region36
        $region35: #{tpu_custom_call.1} parent=27 // pred_region
          %182 = dma.done [#allocation6], 6144
        $region36: #{tpu_custom_call.1} parent=27 // pred_fallthru
          _
        %s183 = sand.u32 %s42, 1
        %s184 = scalar_lea.sflag [#allocation3], %s183
        %s185 = sand.u32 %s42, 1
        %s186 = smul.addr %s185, 16
        %s187 = scalar_lea.vmem [#allocation2], %s186
        %p188 = pneg %p55
        %p189 = pneg %p52
        %p190 = pneg %p76
        %p191 = pneg %p73
        %p192 = pneg %p104
        %p193 = pneg %p101
        %s194 = sand.u32 %s91, 1
        %s195 = scalar_lea.sflag [#allocation4], %s194
        %s196 = sand.u32 %s91, 1
        %s197 = smul.addr %s196, 48
        %s198 = scalar_lea.vmem [#allocation7], %s197
        %s199 = smul.u32 2, %s25
        %s200 = smul.u32 2, %s25
        %v201 = vld [vmem:[%s172] sm:$0xff]
        %v202 = vld [vmem:[%s172 + $0x8] sm:$0xff]
        %v203 = vld [vmem:[#allocation5] sm:$0xff]
        %v204 = vld [vmem:[#allocation5 + $0x8] sm:$0xff]
        %v205 = vld [vmem:[#allocation5 + $0x10] sm:$0xff]
        %v206 = vld [vmem:[#allocation5 + $0x18] sm:$0xff]
        %v207 = vld [vmem:[#allocation5 + $0x20] sm:$0xff]
        %v208 = vld [vmem:[#allocation5 + $0x28] sm:$0xff]
        %v209 = vld [vmem:[#allocation5 + $0x30] sm:$0xff]
        %v210 = vld [vmem:[#allocation5 + $0x38] sm:$0xff]
        %v211 = vld [vmem:[#allocation5 + $0x40] sm:$0xff]
        %v212 = vld [vmem:[#allocation5 + $0x48] sm:$0xff]
        %v213 = vld [vmem:[#allocation5 + $0x50] sm:$0xff]
        %v214 = vld [vmem:[#allocation5 + $0x58] sm:$0xff]
        %v215 = vld [vmem:[#allocation5 + $0x60] sm:$0xff]
        %v216 = vld [vmem:[#allocation5 + $0x68] sm:$0xff]
        %v217 = vld [vmem:[#allocation5 + $0x70] sm:$0xff]
        %v218 = vld [vmem:[#allocation5 + $0x78] sm:$0xff]
        %v219 = vld [vmem:[#allocation5 + $0x80] sm:$0xff]
        %v220 = vld [vmem:[#allocation5 + $0x88] sm:$0xff]
        %v221 = vld [vmem:[#allocation5 + $0x90] sm:$0xff]
        %v222 = vld [vmem:[#allocation5 + $0x98] sm:$0xff]
        %v223 = vld [vmem:[#allocation5 + $0xa0] sm:$0xff]
        %v224 = vld [vmem:[#allocation5 + $0xa8] sm:$0xff]
        %v225 = vld [vmem:[#allocation5 + $0xb0] sm:$0xff]
        %v226 = vld [vmem:[#allocation5 + $0xb8] sm:$0xff]
        %v227 = vld [vmem:[#allocation5 + $0xc0] sm:$0xff]
        %v228 = vld [vmem:[#allocation5 + $0xc8] sm:$0xff]
        %v229 = vld [vmem:[#allocation5 + $0xd0] sm:$0xff]
        %v230 = vld [vmem:[#allocation5 + $0xd8] sm:$0xff]
        %v231 = vld [vmem:[#allocation5 + $0xe0] sm:$0xff]
        %v232 = vld [vmem:[#allocation5 + $0xe8] sm:$0xff]
        %v233 = vld [vmem:[#allocation5 + $0xf0] sm:$0xff]
        %v234 = vld [vmem:[#allocation5 + $0xf8] sm:$0xff]
        %v235 = vld [vmem:[#allocation5 + $0x100] sm:$0xff]
        %v236 = vld [vmem:[#allocation5 + $0x108] sm:$0xff]
        %v237 = vld [vmem:[#allocation5 + $0x110] sm:$0xff]
        %v238 = vld [vmem:[#allocation5 + $0x118] sm:$0xff]
        %v239 = vld [vmem:[#allocation5 + $0x120] sm:$0xff]
        %v240 = vld [vmem:[#allocation5 + $0x128] sm:$0xff]
        %v241 = vld [vmem:[#allocation5 + $0x130] sm:$0xff]
        %v242 = vld [vmem:[#allocation5 + $0x138] sm:$0xff]
        %v243 = vld [vmem:[#allocation5 + $0x140] sm:$0xff]
        %v244 = vld [vmem:[#allocation5 + $0x148] sm:$0xff]
        %v245 = vld [vmem:[#allocation5 + $0x150] sm:$0xff]
        %v246 = vld [vmem:[#allocation5 + $0x158] sm:$0xff]
        %v247 = vld [vmem:[#allocation5 + $0x160] sm:$0xff]
        %v248 = vld [vmem:[#allocation5 + $0x168] sm:$0xff]
        %v249 = vld [vmem:[#allocation5 + $0x170] sm:$0xff]
        %v250 = vld [vmem:[#allocation5 + $0x178] sm:$0xff]
        %251 = vmatpush.msra.mxu0 %v248
        %252 = vmatpush.msra.mxu0 %v245
        %253 = vmatpush.msra.mxu0 %v242
        %254 = vmatpush.msra.mxu0 %v239
        %255 = vmatpush.msra.mxu0 %v236
        %256 = vmatpush.msra.mxu0 %v233
        %257 = vmatpush.msra.mxu0 %v230
        %258 = vmatpush.msra.mxu0 %v227
        %259 = vmatpush.msra.mxu0 %v224
        %260 = vmatpush.msra.mxu0 %v221
        %261 = vmatpush.msra.mxu0 %v218
        %262 = vmatpush.msra.mxu0 %v215
        %263 = vmatpush.msra.mxu0 %v212
        %264 = vmatpush.msra.mxu0 %v209
        %265 = vmatpush.msra.mxu0 %v206
        %266 = vmatpush.msra.mxu0 %v203
        %267 = vmatmul.f32.gmra.mxu0 %v201
        %v268 = vpop.f32.mrf.mxu0
        %v269 = vadd.f32 0.0, %v268
        %270 = vmatmul.f32.gmra.mxu0 %v202
        %v271 = vpop.f32.mrf.mxu0
        %v272 = vadd.f32 0.0, %v271
        %273 = vdwg.mxu0
        %274 = vmatpush.msra.mxu0 %v249
        %275 = vmatpush.msra.mxu0 %v246
        %276 = vmatpush.msra.mxu0 %v243
        %277 = vmatpush.msra.mxu0 %v240
        %278 = vmatpush.msra.mxu0 %v237
        %279 = vmatpush.msra.mxu0 %v234
        %280 = vmatpush.msra.mxu0 %v231
        %281 = vmatpush.msra.mxu0 %v228
        %282 = vmatpush.msra.mxu0 %v225
        %283 = vmatpush.msra.mxu0 %v222
        %284 = vmatpush.msra.mxu0 %v219
        %285 = vmatpush.msra.mxu0 %v216
        %286 = vmatpush.msra.mxu0 %v213
        %287 = vmatpush.msra.mxu0 %v210
        %288 = vmatpush.msra.mxu0 %v207
        %289 = vmatpush.msra.mxu0 %v204
        %290 = vmatmul.f32.gmra.mxu0 %v201
        %v291 = vpop.f32.mrf.mxu0
        %v292 = vadd.f32 0.0, %v291
        %293 = vmatmul.f32.gmra.mxu0 %v202
        %v294 = vpop.f32.mrf.mxu0
        %v295 = vadd.f32 0.0, %v294
        %296 = vdwg.mxu0
        %297 = vmatpush.msra.mxu0 %v250
        %298 = vmatpush.msra.mxu0 %v247
        %299 = vmatpush.msra.mxu0 %v244
        %300 = vmatpush.msra.mxu0 %v241
        %301 = vmatpush.msra.mxu0 %v238
        %302 = vmatpush.msra.mxu0 %v235
        %303 = vmatpush.msra.mxu0 %v232
        %304 = vmatpush.msra.mxu0 %v229
        %305 = vmatpush.msra.mxu0 %v226
        %306 = vmatpush.msra.mxu0 %v223
        %307 = vmatpush.msra.mxu0 %v220
        %308 = vmatpush.msra.mxu0 %v217
        %309 = vmatpush.msra.mxu0 %v214
        %310 = vmatpush.msra.mxu0 %v211
        %311 = vmatpush.msra.mxu0 %v208
        %312 = vmatpush.msra.mxu0 %v205
        %313 = vmatmul.f32.gmra.mxu0 %v201
        %v314 = vpop.f32.mrf.mxu0
        %v315 = vadd.f32 0.0, %v314
        %316 = vmatmul.f32.gmra.mxu0 %v202
        %v317 = vpop.f32.mrf.mxu0
        %v318 = vadd.f32 0.0, %v317
        %319 = vdwg.mxu0
        %320 = vst [vmem:[%s198] sm:$0xff] %v269
        %321 = vst [vmem:[%s198 + $0x8] sm:$0xff] %v292
        %322 = vst [vmem:[%s198 + $0x10] sm:$0xff] %v315
        %323 = vst [vmem:[%s198 + $0x18] sm:$0xff] %v272
        %324 = vst [vmem:[%s198 + $0x20] sm:$0xff] %v295
        %325 = vst [vmem:[%s198 + $0x28] sm:$0xff] %v318
        %s326 = sand.u32 %s91, 1
        %s327 = scalar_lea.sflag [#allocation4], %s326
        %s328 = sand.u32 %s91, 1
        %s329 = smul.addr %s328, 48
        %s330 = scalar_lea.vmem [#allocation7], %s329
        // Predicated region
        $region37: #{tpu_custom_call.1} parent=27 // pred_check
          %p331 = pneg %p101
        $region38: #{tpu_custom_call.1} parent=27 // pred_check_branch
          %333 = sbr.rel (%p331) target = $region40
        $region39: #{tpu_custom_call.1} parent=27 // pred_region
          %s334 = smul.u32 2, %s25
          %336 = vsyncadd %s327, 0
          %s337 = smul.addr %s334, 3
          %s338 = smul.addr %s24, 24
          %s339 = sadd.s32 %s337, %s338
          %s340 = smul.addr %s339, 8
          %s341 = scalar_lea.hbm %s2, %s340
          %s342 = sshll.u32 %s330, 4
          %s343 = int_to_ptr.vmem [resolvable:$true] %s342
          %s344 = sshll.u32 %s341, 4
          %s345 = int_to_ptr.hbm [resolvable:$true] %s344
          %350 = dma.vmem_to_hbm [thread:$0]  %s343, 768, %s345, %s327, 384, 384, 24
        $region40: #{tpu_custom_call.1} parent=27 // pred_fallthru
          _
      $region28: #{tpu_custom_call.1} parent=5 // pred_fallthru
        _
      %p351 = scmp.le.s32.totalorder 2, %s15
      // Predicated region
      $region41: #{tpu_custom_call.1} parent=5 // pred_check
        %p352 = pneg %p351
      $region42: #{tpu_custom_call.1} parent=5 // pred_check_branch
        %354 = sbr.rel (%p352) target = $region44
      $region43: #{tpu_custom_call.1} parent=5 // pred_region
        %s355 = ssub.s32 %s15, 2
        // Predicated region
        $region45: #{tpu_custom_call.1} parent=43 // pred_check
          %p356 = pneg %p107
        $region46: #{tpu_custom_call.1} parent=43 // pred_check_branch
          %358 = sbr.rel (%p356) target = $region48
        $region47: #{tpu_custom_call.1} parent=43 // pred_region
          %s359 = sand.u32 %s92, 1
          %s360 = scalar_lea.sflag [#allocation4], %s359
          %s361 = sand.u32 %s92, 1
          %s362 = smul.addr %s361, 48
          %s363 = scalar_lea.vmem [#allocation7], %s362
          %365 = dma.done %s360, 768
        $region48: #{tpu_custom_call.1} parent=43 // pred_fallthru
          _
      $region44: #{tpu_custom_call.1} parent=5 // pred_fallthru
        _
    $region6: #{tpu_custom_call.1} parent=1 // loop_footer
      %s19 = sadd.s32 1, %s15
    $region7: #{tpu_custom_call.1} parent=1 // loop_footer_branch
      %14 = sbr.rel target = $region3
    $region8: #{tpu_custom_call.1} parent=1 // loop_exit
      _
    %366 = vsyncpa [#allocation3], 1
    %s367 = scalar_lea.sflag [#allocation3], 1
    %368 = vsyncpa %s367, 1
    %369 = vsyncpa [#allocation6], 1
    %370 = vsyncpa [#allocation4], 1
    %s371 = scalar_lea.sflag [#allocation4], 1
    %372 = vsyncpa %s371, 1

</llo_original>
